<compile_context>
chip_gen: v5e
topology: v5e:2x2
jax: 0.10.0
libtpu: 0.0.40
codegen_flags: <defaults>
</compile_context>

<pallas_src>
import functools

import jax
import jax.numpy as jnp
import numpy as np
from jax import lax
from jax.experimental import pallas as pl
from jax.experimental.pallas import tpu as pltpu


def conv1d_block_kernel(x_ref, w_ref, params_ref, mask_ref, maskT_ref, o_ref,
                        *, kernel_size, eps, use_mxu):
    # x_ref:      (1, C_in, L)      unpadded input for this batch element
    # w_ref:      (C_out, K*C_in)   conv weight, columns k-major then c_in
    # params_ref: (C_out, 3)        columns = [bias, gamma, beta]
    # mask_ref:   (G, C_out)        1.0 where channel belongs to group
    # maskT_ref:  (C_out, G)
    # o_ref:      (1, C_out, L)
    c_in = x_ref.shape[1]
    c_out = o_ref.shape[1]
    l_out = o_ref.shape[2]
    pad = kernel_size // 2

    x = x_ref[0].astype(jnp.float32)                       # (C_in, L)
    w = w_ref[...].astype(jnp.float32)                     # (C_out, K*C_in)
    params = params_ref[...]                               # (C_out, 3)
    bias = params[:, 0:1]
    gamma = params[:, 1:2]
    beta = params[:, 2:3]

    # --- zero halo built in-kernel (no wrapper pad pass) ----------------------
    zhalo = jnp.zeros((c_in, pad), dtype=jnp.float32)
    xp = jnp.concatenate([zhalo, x, zhalo], axis=1)        # (C_in, L + 2*pad)

    # --- Conv1d ---------------------------------------------------------------
    if use_mxu:
        # im2col with contraction depth C_in*K; rows k-major to match w layout.
        xcol = jnp.concatenate(
            [xp[:, k:k + l_out] for k in range(kernel_size)], axis=0)
        y = jnp.dot(w, xcol, preferred_element_type=jnp.float32)
    else:
        # Tiny contraction depth: VPU broadcast-FMA (outer products); keeps the
        # vex/MXU slot free and avoids MRF push/pop latency.
        y = jnp.zeros((c_out, l_out), dtype=jnp.float32)
        for k in range(kernel_size):
            xs = xp[:, k:k + l_out]                        # (C_in, L)
            for ci in range(c_in):
                col = k * c_in + ci
                y = y + w[:, col:col + 1] * xs[ci:ci + 1, :]
    y = y + bias                                           # (C_out, L)

    # --- GroupNorm: fused indicator-matmul statistics -------------------------
    group_size = c_out // mask_ref.shape[0]
    inv_n = 1.0 / float(group_size * l_out)

    stats_c = jnp.concatenate(
        [jnp.sum(y, axis=1, keepdims=True),
         jnp.sum(y * y, axis=1, keepdims=True)], axis=1)   # (C_out, 2)
    stats_g = jnp.dot(mask_ref[...], stats_c,
                      preferred_element_type=jnp.float32)  # (G, 2)
    mean_g = stats_g[:, 0:1] * inv_n
    var_g = jnp.maximum(stats_g[:, 1:2] * inv_n - mean_g * mean_g, 0.0)
    rstd_g = lax.rsqrt(var_g + eps)
    norm_c = jnp.dot(maskT_ref[...],
                     jnp.concatenate([mean_g, rstd_g], axis=1),
                     preferred_element_type=jnp.float32)   # (C_out, 2)
    a = gamma * norm_c[:, 1:2]                             # gamma * rstd
    b = beta - norm_c[:, 0:1] * a                          # beta  - mean * a
    y_aff = y * a + b                                      # single FMA per elem

    # --- Mish: x * tanh(softplus(x)) = x * ((1+e^x)^2-1)/((1+e^x)^2+1) --------
    e = jnp.exp(y_aff)                                     # the only EUP op
    num = e * (e + 2.0)                                    # (1+e)^2 - 1
    tsp = num / (num + 2.0)                                # tanh(softplus(x))
    out = jnp.where(y_aff > 20.0, y_aff, y_aff * tsp)      # guard e^x overflow

    o_ref[...] = out[None].astype(o_ref.dtype)


def conv1d_block(x, weight, bias, gamma, beta, *, n_groups, eps=1e-5):
    """x: (B, C_in, L); weight: (C_out, C_in, K); returns (B, C_out, L)."""
    B, C_in, L = x.shape
    C_out, C_in_w, K = weight.shape
    assert C_in_w == C_in, "weight C_in mismatch"
    assert K % 2 == 1, "Conv1dBlock requires odd kernel_size (so L_out == L)"
    assert C_out % n_groups == 0, "out_channels must be divisible by n_groups"

    # Weight as (C_out, K*C_in), columns k-major (matches in-kernel im2col).
    w2 = jnp.transpose(weight, (0, 2, 1)).reshape(C_out, K * C_in)
    params = jnp.stack([bias, gamma, beta], axis=1).astype(jnp.float32)

    group_ids = jnp.arange(C_out) // (C_out // n_groups)
    mask = (group_ids[None, :] == jnp.arange(n_groups)[:, None]).astype(jnp.float32)
    mask_t = mask.T

    use_mxu = (C_in * K) > 32   # tiny contraction depths are cheaper on the VPU
    kernel = functools.partial(conv1d_block_kernel, kernel_size=K, eps=eps,
                               use_mxu=use_mxu)

    return pl.pallas_call(
        kernel,
        out_shape=jax.ShapeDtypeStruct((B, C_out, L), x.dtype),
        grid_spec=pltpu.PrefetchScalarGridSpec(
            num_scalar_prefetch=0,
            grid=(B,),
            in_specs=[
                pl.BlockSpec((1, C_in, L), lambda b: (b, 0, 0)),
                pl.BlockSpec((C_out, K * C_in), lambda b: (0, 0)),
                pl.BlockSpec((C_out, 3), lambda b: (0, 0)),
                pl.BlockSpec((n_groups, C_out), lambda b: (0, 0)),
                pl.BlockSpec((C_out, n_groups), lambda b: (0, 0)),
            ],
            out_specs=pl.BlockSpec((1, C_out, L), lambda b: (b, 0, 0)),
        ),
        compiler_params=pltpu.CompilerParams(
            dimension_semantics=("parallel",)),
    )(x, w2, params, mask, mask_t)


def reference_forward(x, weight, bias, gamma, beta, *, n_groups, eps=1e-5):
    K = weight.shape[-1]
    y = lax.conv_general_dilated(
        x, weight, window_strides=(1,), padding=[(K // 2, K // 2)],
        dimension_numbers=("NCH", "OIH", "NCH"))
    y = y + bias[None, :, None]
    B, C, L = y.shape
    yg = y.reshape(B, n_groups, (C // n_groups) * L)
    mean = yg.mean(-1, keepdims=True)
    var = yg.var(-1, keepdims=True)
    yn = ((yg - mean) / jnp.sqrt(var + eps)).reshape(B, C, L)
    ya = yn * gamma[None, :, None] + beta[None, :, None]
    return ya * jnp.tanh(jax.nn.softplus(ya))


if __name__ == "__main__":
    # Module config consistent with Conv1dBlock(inp, out, k, n_groups=8).
    batch = 2
    inp_channels = 4
    out_channels = 32
    kernel_size = 3
    horizon = 16
    n_groups = 8

    key = jax.random.PRNGKey(0)
    kx, kw, kb, kg, kbe = jax.random.split(key, 5)

    x = jax.random.normal(kx, (batch, inp_channels, horizon), dtype=jnp.float32)

    # Deterministic synthetic parameter init (PyTorch-style fan-in scaling).
    fan_in = inp_channels * kernel_size
    bound = 1.0 / np.sqrt(fan_in)
    weight = jax.random.uniform(kw, (out_channels, inp_channels, kernel_size),
                                minval=-bound, maxval=bound, dtype=jnp.float32)
    bias = jax.random.uniform(kb, (out_channels,), minval=-bound, maxval=bound,
                              dtype=jnp.float32)
    gamma = 1.0 + 0.1 * jax.random.normal(kg, (out_channels,), dtype=jnp.float32)
    beta = 0.1 * jax.random.normal(kbe, (out_channels,), dtype=jnp.float32)

    out = conv1d_block(x, weight, bias, gamma, beta, n_groups=n_groups)
    out = jax.block_until_ready(out)

    ref = jax.block_until_ready(
        reference_forward(x, weight, bias, gamma, beta, n_groups=n_groups))

    np.testing.assert_allclose(np.asarray(out), np.asarray(ref),
                               rtol=1e-4, atol=1e-5)
    print("KERNEL_OK")
</pallas_src>

<mosaic_0001>
module attributes {stable_mosaic.version = 11 : i64} {
  func.func @conv1d_block_kernel(%arg0: i32, %arg1: memref<1x4x16xf32, #tpu.memory_space<vmem>>, %arg2: memref<32x12xf32, #tpu.memory_space<vmem>>, %arg3: memref<32x3xf32, #tpu.memory_space<vmem>>, %arg4: memref<8x32xf32, #tpu.memory_space<vmem>>, %arg5: memref<32x8xf32, #tpu.memory_space<vmem>>, %arg6: memref<1x32x16xf32, #tpu.memory_space<vmem>>) attributes {dimension_semantics = [#tpu.dimension_semantics<parallel>], iteration_bounds = array<i64: 2>, scalar_prefetch = 0 : i64, scratch_operands = 0 : i64, tpu.core_type = #tpu.core_type<tc>, window_params = [{transform_indices = @transform_0, window_bounds = array<i64: 1, 4, 16>}, {pipeline_mode = #tpu.pipeline_mode<synchronous>, transform_indices = @transform_1, window_bounds = array<i64: 32, 12>}, {pipeline_mode = #tpu.pipeline_mode<synchronous>, transform_indices = @transform_2, window_bounds = array<i64: 32, 3>}, {pipeline_mode = #tpu.pipeline_mode<synchronous>, transform_indices = @transform_3, window_bounds = array<i64: 8, 32>}, {pipeline_mode = #tpu.pipeline_mode<synchronous>, transform_indices = @transform_4, window_bounds = array<i64: 32, 8>}, {transform_indices = @transform_5, window_bounds = array<i64: 1, 32, 16>}]} {
    %c0 = arith.constant 0 : index
    %c0_0 = arith.constant 0 : index
    %c0_1 = arith.constant 0 : index
    %0 = vector.load %arg1[%c0, %c0_0, %c0_1] : memref<1x4x16xf32, #tpu.memory_space<vmem>>, vector<1x4x16xf32>
    %1 = vector.shape_cast %0 : vector<1x4x16xf32> to vector<4x16xf32>
    %c0_2 = arith.constant 0 : index
    %c0_3 = arith.constant 0 : index
    %2 = vector.load %arg2[%c0_2, %c0_3] : memref<32x12xf32, #tpu.memory_space<vmem>>, vector<32x12xf32>
    %c0_4 = arith.constant 0 : index
    %c0_5 = arith.constant 0 : index
    %3 = vector.load %arg3[%c0_4, %c0_5] : memref<32x3xf32, #tpu.memory_space<vmem>>, vector<32x3xf32>
    %4 = vector.extract_strided_slice %3 {offsets = [0, 0], sizes = [32, 1], strides = [1, 1]} : vector<32x3xf32> to vector<32x1xf32>
    %5 = vector.extract_strided_slice %3 {offsets = [0, 1], sizes = [32, 1], strides = [1, 1]} : vector<32x3xf32> to vector<32x1xf32>
    %6 = vector.extract_strided_slice %3 {offsets = [0, 2], sizes = [32, 1], strides = [1, 1]} : vector<32x3xf32> to vector<32x1xf32>
    %cst = arith.constant 0.000000e+00 : f32
    %7 = vector.broadcast %cst : f32 to vector<4x1xf32>
    %8 = tpu.concatenate %7, %1, %7 in 1 : vector<4x1xf32>, vector<4x16xf32>, vector<4x1xf32> -> vector<4x18xf32>
    %cst_6 = arith.constant 0.000000e+00 : f32
    %9 = vector.broadcast %cst_6 : f32 to vector<32x16xf32>
    %10 = vector.extract_strided_slice %8 {offsets = [0, 0], sizes = [4, 16], strides = [1, 1]} : vector<4x18xf32> to vector<4x16xf32>
    %11 = vector.extract_strided_slice %2 {offsets = [0, 0], sizes = [32, 1], strides = [1, 1]} : vector<32x12xf32> to vector<32x1xf32>
    %12 = vector.extract_strided_slice %10 {offsets = [0, 0], sizes = [1, 16], strides = [1, 1]} : vector<4x16xf32> to vector<1x16xf32>
    %13 = vector.broadcast %11 : vector<32x1xf32> to vector<32x16xf32>
    %14 = vector.broadcast %12 : vector<1x16xf32> to vector<32x16xf32>
    %15 = arith.mulf %13, %14 : vector<32x16xf32>
    %16 = arith.addf %9, %15 : vector<32x16xf32>
    %17 = vector.extract_strided_slice %2 {offsets = [0, 1], sizes = [32, 1], strides = [1, 1]} : vector<32x12xf32> to vector<32x1xf32>
    %18 = vector.extract_strided_slice %10 {offsets = [1, 0], sizes = [1, 16], strides = [1, 1]} : vector<4x16xf32> to vector<1x16xf32>
    %19 = vector.broadcast %17 : vector<32x1xf32> to vector<32x16xf32>
    %20 = vector.broadcast %18 : vector<1x16xf32> to vector<32x16xf32>
    %21 = arith.mulf %19, %20 : vector<32x16xf32>
    %22 = arith.addf %16, %21 : vector<32x16xf32>
    %23 = vector.extract_strided_slice %2 {offsets = [0, 2], sizes = [32, 1], strides = [1, 1]} : vector<32x12xf32> to vector<32x1xf32>
    %24 = vector.extract_strided_slice %10 {offsets = [2, 0], sizes = [1, 16], strides = [1, 1]} : vector<4x16xf32> to vector<1x16xf32>
    %25 = vector.broadcast %23 : vector<32x1xf32> to vector<32x16xf32>
    %26 = vector.broadcast %24 : vector<1x16xf32> to vector<32x16xf32>
    %27 = arith.mulf %25, %26 : vector<32x16xf32>
    %28 = arith.addf %22, %27 : vector<32x16xf32>
    %29 = vector.extract_strided_slice %2 {offsets = [0, 3], sizes = [32, 1], strides = [1, 1]} : vector<32x12xf32> to vector<32x1xf32>
    %30 = vector.extract_strided_slice %10 {offsets = [3, 0], sizes = [1, 16], strides = [1, 1]} : vector<4x16xf32> to vector<1x16xf32>
    %31 = vector.broadcast %29 : vector<32x1xf32> to vector<32x16xf32>
    %32 = vector.broadcast %30 : vector<1x16xf32> to vector<32x16xf32>
    %33 = arith.mulf %31, %32 : vector<32x16xf32>
    %34 = arith.addf %28, %33 : vector<32x16xf32>
    %35 = vector.extract_strided_slice %8 {offsets = [0, 1], sizes = [4, 16], strides = [1, 1]} : vector<4x18xf32> to vector<4x16xf32>
    %36 = vector.extract_strided_slice %2 {offsets = [0, 4], sizes = [32, 1], strides = [1, 1]} : vector<32x12xf32> to vector<32x1xf32>
    %37 = vector.extract_strided_slice %35 {offsets = [0, 0], sizes = [1, 16], strides = [1, 1]} : vector<4x16xf32> to vector<1x16xf32>
    %38 = vector.broadcast %36 : vector<32x1xf32> to vector<32x16xf32>
    %39 = vector.broadcast %37 : vector<1x16xf32> to vector<32x16xf32>
    %40 = arith.mulf %38, %39 : vector<32x16xf32>
    %41 = arith.addf %34, %40 : vector<32x16xf32>
    %42 = vector.extract_strided_slice %2 {offsets = [0, 5], sizes = [32, 1], strides = [1, 1]} : vector<32x12xf32> to vector<32x1xf32>
    %43 = vector.extract_strided_slice %35 {offsets = [1, 0], sizes = [1, 16], strides = [1, 1]} : vector<4x16xf32> to vector<1x16xf32>
    %44 = vector.broadcast %42 : vector<32x1xf32> to vector<32x16xf32>
    %45 = vector.broadcast %43 : vector<1x16xf32> to vector<32x16xf32>
    %46 = arith.mulf %44, %45 : vector<32x16xf32>
    %47 = arith.addf %41, %46 : vector<32x16xf32>
    %48 = vector.extract_strided_slice %2 {offsets = [0, 6], sizes = [32, 1], strides = [1, 1]} : vector<32x12xf32> to vector<32x1xf32>
    %49 = vector.extract_strided_slice %35 {offsets = [2, 0], sizes = [1, 16], strides = [1, 1]} : vector<4x16xf32> to vector<1x16xf32>
    %50 = vector.broadcast %48 : vector<32x1xf32> to vector<32x16xf32>
    %51 = vector.broadcast %49 : vector<1x16xf32> to vector<32x16xf32>
    %52 = arith.mulf %50, %51 : vector<32x16xf32>
    %53 = arith.addf %47, %52 : vector<32x16xf32>
    %54 = vector.extract_strided_slice %2 {offsets = [0, 7], sizes = [32, 1], strides = [1, 1]} : vector<32x12xf32> to vector<32x1xf32>
    %55 = vector.extract_strided_slice %35 {offsets = [3, 0], sizes = [1, 16], strides = [1, 1]} : vector<4x16xf32> to vector<1x16xf32>
    %56 = vector.broadcast %54 : vector<32x1xf32> to vector<32x16xf32>
    %57 = vector.broadcast %55 : vector<1x16xf32> to vector<32x16xf32>
    %58 = arith.mulf %56, %57 : vector<32x16xf32>
    %59 = arith.addf %53, %58 : vector<32x16xf32>
    %60 = vector.extract_strided_slice %8 {offsets = [0, 2], sizes = [4, 16], strides = [1, 1]} : vector<4x18xf32> to vector<4x16xf32>
    %61 = vector.extract_strided_slice %2 {offsets = [0, 8], sizes = [32, 1], strides = [1, 1]} : vector<32x12xf32> to vector<32x1xf32>
    %62 = vector.extract_strided_slice %60 {offsets = [0, 0], sizes = [1, 16], strides = [1, 1]} : vector<4x16xf32> to vector<1x16xf32>
    %63 = vector.broadcast %61 : vector<32x1xf32> to vector<32x16xf32>
    %64 = vector.broadcast %62 : vector<1x16xf32> to vector<32x16xf32>
    %65 = arith.mulf %63, %64 : vector<32x16xf32>
    %66 = arith.addf %59, %65 : vector<32x16xf32>
    %67 = vector.extract_strided_slice %2 {offsets = [0, 9], sizes = [32, 1], strides = [1, 1]} : vector<32x12xf32> to vector<32x1xf32>
    %68 = vector.extract_strided_slice %60 {offsets = [1, 0], sizes = [1, 16], strides = [1, 1]} : vector<4x16xf32> to vector<1x16xf32>
    %69 = vector.broadcast %67 : vector<32x1xf32> to vector<32x16xf32>
    %70 = vector.broadcast %68 : vector<1x16xf32> to vector<32x16xf32>
    %71 = arith.mulf %69, %70 : vector<32x16xf32>
    %72 = arith.addf %66, %71 : vector<32x16xf32>
    %73 = vector.extract_strided_slice %2 {offsets = [0, 10], sizes = [32, 1], strides = [1, 1]} : vector<32x12xf32> to vector<32x1xf32>
    %74 = vector.extract_strided_slice %60 {offsets = [2, 0], sizes = [1, 16], strides = [1, 1]} : vector<4x16xf32> to vector<1x16xf32>
    %75 = vector.broadcast %73 : vector<32x1xf32> to vector<32x16xf32>
    %76 = vector.broadcast %74 : vector<1x16xf32> to vector<32x16xf32>
    %77 = arith.mulf %75, %76 : vector<32x16xf32>
    %78 = arith.addf %72, %77 : vector<32x16xf32>
    %79 = vector.extract_strided_slice %2 {offsets = [0, 11], sizes = [32, 1], strides = [1, 1]} : vector<32x12xf32> to vector<32x1xf32>
    %80 = vector.extract_strided_slice %60 {offsets = [3, 0], sizes = [1, 16], strides = [1, 1]} : vector<4x16xf32> to vector<1x16xf32>
    %81 = vector.broadcast %79 : vector<32x1xf32> to vector<32x16xf32>
    %82 = vector.broadcast %80 : vector<1x16xf32> to vector<32x16xf32>
    %83 = arith.mulf %81, %82 : vector<32x16xf32>
    %84 = arith.addf %78, %83 : vector<32x16xf32>
    %85 = vector.broadcast %4 : vector<32x1xf32> to vector<32x16xf32>
    %86 = arith.addf %84, %85 : vector<32x16xf32>
    %cst_7 = arith.constant dense<0.000000e+00> : vector<32xf32>
    %87 = vector.multi_reduction <add>, %86, %cst_7 [1] : vector<32x16xf32> to vector<32xf32>
    %88 = vector.shape_cast %87 : vector<32xf32> to vector<32x1xf32>
    %89 = arith.mulf %86, %86 : vector<32x16xf32>
    %cst_8 = arith.constant dense<0.000000e+00> : vector<32xf32>
    %90 = vector.multi_reduction <add>, %89, %cst_8 [1] : vector<32x16xf32> to vector<32xf32>
    %91 = vector.shape_cast %90 : vector<32xf32> to vector<32x1xf32>
    %92 = tpu.concatenate %88, %91 in 1 : vector<32x1xf32>, vector<32x1xf32> -> vector<32x2xf32>
    %c0_9 = arith.constant 0 : index
    %c0_10 = arith.constant 0 : index
    %93 = vector.load %arg4[%c0_9, %c0_10] : memref<8x32xf32, #tpu.memory_space<vmem>>, vector<8x32xf32>
    %cst_11 = arith.constant dense<0.000000e+00> : vector<8x2xf32>
    %94 = tpu.matmul %93, %92, %cst_11 {dimension_numbers = #tpu.dot_dimension_numbers<[1], [0], [0], [1], [0, 0, 1, 1], [], []>} : vector<8x32xf32>, vector<32x2xf32>, vector<8x2xf32> -> vector<8x2xf32>
    %95 = vector.extract_strided_slice %94 {offsets = [0, 0], sizes = [8, 1], strides = [1, 1]} : vector<8x2xf32> to vector<8x1xf32>
    %cst_12 = arith.constant 1.562500e-02 : f32
    %96 = vector.broadcast %cst_12 : f32 to vector<8x1xf32>
    %97 = arith.mulf %95, %96 : vector<8x1xf32>
    %98 = vector.extract_strided_slice %94 {offsets = [0, 1], sizes = [8, 1], strides = [1, 1]} : vector<8x2xf32> to vector<8x1xf32>
    %cst_13 = arith.constant 1.562500e-02 : f32
    %99 = vector.broadcast %cst_13 : f32 to vector<8x1xf32>
    %100 = arith.mulf %98, %99 : vector<8x1xf32>
    %101 = arith.mulf %97, %97 : vector<8x1xf32>
    %102 = arith.subf %100, %101 : vector<8x1xf32>
    %cst_14 = arith.constant 0.000000e+00 : f32
    %103 = vector.broadcast %cst_14 : f32 to vector<8x1xf32>
    %104 = arith.maximumf %102, %103 : vector<8x1xf32>
    %cst_15 = arith.constant 9.99999974E-6 : f32
    %105 = vector.broadcast %cst_15 : f32 to vector<8x1xf32>
    %106 = arith.addf %104, %105 : vector<8x1xf32>
    %107 = math.rsqrt %106 : vector<8x1xf32>
    %c0_16 = arith.constant 0 : index
    %c0_17 = arith.constant 0 : index
    %108 = vector.load %arg5[%c0_16, %c0_17] : memref<32x8xf32, #tpu.memory_space<vmem>>, vector<32x8xf32>
    %109 = tpu.concatenate %97, %107 in 1 : vector<8x1xf32>, vector<8x1xf32> -> vector<8x2xf32>
    %cst_18 = arith.constant dense<0.000000e+00> : vector<32x2xf32>
    %110 = tpu.matmul %108, %109, %cst_18 {dimension_numbers = #tpu.dot_dimension_numbers<[1], [0], [0], [1], [0, 0, 1, 1], [], []>} : vector<32x8xf32>, vector<8x2xf32>, vector<32x2xf32> -> vector<32x2xf32>
    %111 = vector.extract_strided_slice %110 {offsets = [0, 1], sizes = [32, 1], strides = [1, 1]} : vector<32x2xf32> to vector<32x1xf32>
    %112 = arith.mulf %5, %111 : vector<32x1xf32>
    %113 = vector.extract_strided_slice %110 {offsets = [0, 0], sizes = [32, 1], strides = [1, 1]} : vector<32x2xf32> to vector<32x1xf32>
    %114 = arith.mulf %113, %112 : vector<32x1xf32>
    %115 = arith.subf %6, %114 : vector<32x1xf32>
    %116 = vector.broadcast %112 : vector<32x1xf32> to vector<32x16xf32>
    %117 = arith.mulf %86, %116 : vector<32x16xf32>
    %118 = vector.broadcast %115 : vector<32x1xf32> to vector<32x16xf32>
    %119 = arith.addf %117, %118 : vector<32x16xf32>
    %120 = math.exp %119 : vector<32x16xf32>
    %cst_19 = arith.constant 2.000000e+00 : f32
    %121 = vector.broadcast %cst_19 : f32 to vector<32x16xf32>
    %122 = arith.addf %120, %121 : vector<32x16xf32>
    %123 = arith.mulf %120, %122 : vector<32x16xf32>
    %cst_20 = arith.constant 2.000000e+00 : f32
    %124 = vector.broadcast %cst_20 : f32 to vector<32x16xf32>
    %125 = arith.addf %123, %124 : vector<32x16xf32>
    %126 = arith.divf %123, %125 : vector<32x16xf32>
    %cst_21 = arith.constant 2.000000e+01 : f32
    %127 = vector.broadcast %cst_21 : f32 to vector<32x16xf32>
    %128 = arith.cmpf ogt, %119, %127 : vector<32x16xf32>
    %129 = arith.mulf %119, %126 : vector<32x16xf32>
    %130 = arith.select %128, %119, %129 : vector<32x16xi1>, vector<32x16xf32>
    %131 = vector.shape_cast %130 : vector<32x16xf32> to vector<1x32x16xf32>
    %c0_22 = arith.constant 0 : index
    %c0_23 = arith.constant 0 : index
    %c0_24 = arith.constant 0 : index
    %132 = vector.load %arg6[%c0_22, %c0_23, %c0_24] : memref<1x32x16xf32, #tpu.memory_space<vmem>>, vector<1x32x16xf32>
    tpu.vector_store %arg6[%c0_22, %c0_23, %c0_24], %131 {strides = array<i32>} : memref<1x32x16xf32, #tpu.memory_space<vmem>>, vector<1x32x16xf32>,
    return
  }
  func.func @transform_0(%arg0: i32) -> (i32, i32, i32) {
    %c0_i32 = arith.constant 0 : i32
    %c0_i32_0 = arith.constant 0 : i32
    %c0_i32_1 = arith.constant 0 : i32
    return %arg0, %c0_i32, %c0_i32_0 : i32, i32, i32
  }
  func.func @transform_1(%arg0: i32) -> (i32, i32) {
    %c0_i32 = arith.constant 0 : i32
    %c0_i32_0 = arith.constant 0 : i32
    %c0_i32_1 = arith.constant 0 : i32
    return %c0_i32, %c0_i32_0 : i32, i32
  }
  func.func @transform_2(%arg0: i32) -> (i32, i32) {
    %c0_i32 = arith.constant 0 : i32
    %c0_i32_0 = arith.constant 0 : i32
    %c0_i32_1 = arith.constant 0 : i32
    return %c0_i32, %c0_i32_0 : i32, i32
  }
  func.func @transform_3(%arg0: i32) -> (i32, i32) {
    %c0_i32 = arith.constant 0 : i32
    %c0_i32_0 = arith.constant 0 : i32
    %c0_i32_1 = arith.constant 0 : i32
    return %c0_i32, %c0_i32_0 : i32, i32
  }
  func.func @transform_4(%arg0: i32) -> (i32, i32) {
    %c0_i32 = arith.constant 0 : i32
    %c0_i32_0 = arith.constant 0 : i32
    %c0_i32_1 = arith.constant 0 : i32
    return %c0_i32, %c0_i32_0 : i32, i32
  }
  func.func @transform_5(%arg0: i32) -> (i32, i32, i32) {
    %c0_i32 = arith.constant 0 : i32
    %c0_i32_0 = arith.constant 0 : i32
    %c0_i32_1 = arith.constant 0 : i32
    return %arg0, %c0_i32, %c0_i32_0 : i32, i32, i32
  }
}

</mosaic_0001>

<llo_original>
// kernel: tpu_custom_call.1
$region0: #{tpu_custom_call.1}
  #allocation0 [shape = 'u32[]', space=smem, size = 0x4, offset = 0x4, fixed_abs, tag = 'smem constant byte address 0x4 - core index']
  #allocation1 [shape = 'u32[72,128]{1,0:T(1,128)}', space=vmem, size = 0x9000, scoped, tag = 'internal scratch']
  %s0 = inlined_call_operand.vmem [shape: f32[2,4,16], index: 0, kind: input, shape index: {}]
  %s1 = inlined_call_operand.vmem [shape: f32[32,12], index: 1, kind: input, shape index: {}]
  %s2 = inlined_call_operand.vmem [shape: f32[32,3], index: 2, kind: input, shape index: {}]
  %s3 = inlined_call_operand.vmem [shape: f32[8,32], index: 3, kind: input, shape index: {}]
  %s4 = inlined_call_operand.vmem [shape: f32[32,8], index: 4, kind: input, shape index: {}]
  %s5 = inlined_call_operand.vmem [shape: f32[2,32,16], index: 5, kind: output, shape index: {}]
  %s6 = sld [smem:[#allocation0]]
  $region53: #{tpu_custom_call.1} parent=0
    _
  %s8 = ssub.s32 1, %s6
  %s9 = scalar_select 0, %s8, %s6
  loop: start=0, step=1, limit=4
  $region2: #{tpu_custom_call.1} parent=0 // loop_pre_header
    _
  $region3: #{tpu_custom_call.1} parent=0 // loop_header
    %s11 = sphi 0, %s15
    %p12 = scmp.ge.s32.totalorder %s11, 4
    %s21 = sphi 0, %s23
    %s24 = sphi 0, %s21
    %s25 = sphi 0, %s24
    %s41 = sphi 0, %s25
    %s45 = sphi 0, %s45
    %s47 = sphi 0, %s45
    %s48 = sphi 0, %s47
    %s62 = sphi 0, %s48
    %s66 = sphi 0, %s66
    %s68 = sphi 0, %s66
    %s69 = sphi 0, %s68
    %s83 = sphi 0, %s69
    %s87 = sphi 0, %s87
    %s89 = sphi 0, %s87
    %s90 = sphi 0, %s89
    %s104 = sphi 0, %s90
    %s108 = sphi 0, %s108
    %s110 = sphi 0, %s108
    %s111 = sphi 0, %s110
    %s125 = sphi 0, %s111
    %s131 = sphi 0, %s133
    %s134 = sphi 0, %s131
    %s135 = sphi 0, %s134
    %s151 = sphi 0, %s135
  $region4: #{tpu_custom_call.1} parent=0 // loop_header_branch
    %14 = sbr.rel (%p12) target = $region8
  $region5: #{tpu_custom_call.1} parent=0 // loop_body
    %s16 = ssub.s32 %s11, 1
    %s17 = ssub.s32 %s11, 2
    %s18 = sadd.s32 %s11, 1
    %s19 = ssub.s32 %s11, %s18
    %p20 = scmp.eq.s32.totalorder %s19, 0
    %s22 = sadd.s32 %s21, 1
    %s23 = scalar_select %p20, %s21, %s22
    %p26 = pneg %p20
    %p27 = scmp.eq.s32.totalorder %s11, 1
    %p28 = por %p26, %p27
    %p29 = scmp.ne.s32.totalorder %s21, %s24
    %p30 = scmp.eq.s32.totalorder %s11, 0
    %p31 = por %p29, %p30
    %p32 = scmp.ne.s32.totalorder %s21, %s24
    %p33 = scmp.eq.s32.totalorder %s16, 1
    %p34 = por %p32, %p33
    %p35 = scmp.ne.s32.totalorder %s24, %s25
    %p36 = scmp.eq.s32.totalorder %s16, 0
    %p37 = por %p35, %p36
    %p38 = scmp.ne.s32.totalorder %s24, %s25
    %p39 = scmp.eq.s32.totalorder %s17, 1
    %p40 = por %p38, %p39
    %p42 = scmp.ne.s32.totalorder %s25, %s41
    %p43 = scmp.eq.s32.totalorder %s17, 0
    %p44 = por %p42, %p43
    %s46 = sadd.s32 %s45, 1
    %p49 = scmp.eq.s32.totalorder %s11, 1
    %p50 = scmp.ne.s32.totalorder %s45, %s47
    %p51 = scmp.eq.s32.totalorder %s11, 0
    %p52 = por %p50, %p51
    %p53 = scmp.ne.s32.totalorder %s45, %s47
    %p54 = scmp.eq.s32.totalorder %s16, 1
    %p55 = por %p53, %p54
    %p56 = scmp.ne.s32.totalorder %s47, %s48
    %p57 = scmp.eq.s32.totalorder %s16, 0
    %p58 = por %p56, %p57
    %p59 = scmp.ne.s32.totalorder %s47, %s48
    %p60 = scmp.eq.s32.totalorder %s17, 1
    %p61 = por %p59, %p60
    %p63 = scmp.ne.s32.totalorder %s48, %s62
    %p64 = scmp.eq.s32.totalorder %s17, 0
    %p65 = por %p63, %p64
    %s67 = sadd.s32 %s66, 1
    %p70 = scmp.eq.s32.totalorder %s11, 1
    %p71 = scmp.ne.s32.totalorder %s66, %s68
    %p72 = scmp.eq.s32.totalorder %s11, 0
    %p73 = por %p71, %p72
    %p74 = scmp.ne.s32.totalorder %s66, %s68
    %p75 = scmp.eq.s32.totalorder %s16, 1
    %p76 = por %p74, %p75
    %p77 = scmp.ne.s32.totalorder %s68, %s69
    %p78 = scmp.eq.s32.totalorder %s16, 0
    %p79 = por %p77, %p78
    %p80 = scmp.ne.s32.totalorder %s68, %s69
    %p81 = scmp.eq.s32.totalorder %s17, 1
    %p82 = por %p80, %p81
    %p84 = scmp.ne.s32.totalorder %s69, %s83
    %p85 = scmp.eq.s32.totalorder %s17, 0
    %p86 = por %p84, %p85
    %s88 = sadd.s32 %s87, 1
    %p91 = scmp.eq.s32.totalorder %s11, 1
    %p92 = scmp.ne.s32.totalorder %s87, %s89
    %p93 = scmp.eq.s32.totalorder %s11, 0
    %p94 = por %p92, %p93
    %p95 = scmp.ne.s32.totalorder %s87, %s89
    %p96 = scmp.eq.s32.totalorder %s16, 1
    %p97 = por %p95, %p96
    %p98 = scmp.ne.s32.totalorder %s89, %s90
    %p99 = scmp.eq.s32.totalorder %s16, 0
    %p100 = por %p98, %p99
    %p101 = scmp.ne.s32.totalorder %s89, %s90
    %p102 = scmp.eq.s32.totalorder %s17, 1
    %p103 = por %p101, %p102
    %p105 = scmp.ne.s32.totalorder %s90, %s104
    %p106 = scmp.eq.s32.totalorder %s17, 0
    %p107 = por %p105, %p106
    %s109 = sadd.s32 %s108, 1
    %p112 = scmp.eq.s32.totalorder %s11, 1
    %p113 = scmp.ne.s32.totalorder %s108, %s110
    %p114 = scmp.eq.s32.totalorder %s11, 0
    %p115 = por %p113, %p114
    %p116 = scmp.ne.s32.totalorder %s108, %s110
    %p117 = scmp.eq.s32.totalorder %s16, 1
    %p118 = por %p116, %p117
    %p119 = scmp.ne.s32.totalorder %s110, %s111
    %p120 = scmp.eq.s32.totalorder %s16, 0
    %p121 = por %p119, %p120
    %p122 = scmp.ne.s32.totalorder %s110, %s111
    %p123 = scmp.eq.s32.totalorder %s17, 1
    %p124 = por %p122, %p123
    %p126 = scmp.ne.s32.totalorder %s111, %s125
    %p127 = scmp.eq.s32.totalorder %s17, 0
    %p128 = por %p126, %p127
    %s129 = ssub.s32 %s11, %s18
    %p130 = scmp.eq.s32.totalorder %s129, 0
    %s132 = sadd.s32 %s131, 1
    %s133 = scalar_select %p130, %s131, %s132
    %p136 = pneg %p130
    %p137 = scmp.eq.s32.totalorder %s11, 1
    %p138 = por %p136, %p137
    %p139 = scmp.ne.s32.totalorder %s131, %s134
    %p140 = scmp.eq.s32.totalorder %s11, 0
    %p141 = por %p139, %p140
    %p142 = scmp.ne.s32.totalorder %s131, %s134
    %p143 = scmp.eq.s32.totalorder %s16, 1
    %p144 = por %p142, %p143
    %p145 = scmp.ne.s32.totalorder %s134, %s135
    %p146 = scmp.eq.s32.totalorder %s16, 0
    %p147 = por %p145, %p146
    %p148 = scmp.ne.s32.totalorder %s134, %s135
    %p149 = scmp.eq.s32.totalorder %s17, 1
    %p150 = por %p148, %p149
    %p152 = scmp.ne.s32.totalorder %s135, %s151
    %p153 = scmp.eq.s32.totalorder %s17, 0
    %p154 = por %p152, %p153
    %p155 = scmp.le.s32.totalorder 1, %s11
    %p156 = scmp.lt.s32.totalorder %s11, 3
    %p157 = pnand %p155, %p156
    %p158 = pneg %p157
    // Predicated region
    $region9: #{tpu_custom_call.1} parent=5 // pred_check
      _
    $region10: #{tpu_custom_call.1} parent=5 // pred_check_branch
      %160 = sbr.rel (%p157) target = $region12
    $region11: #{tpu_custom_call.1} parent=5 // pred_region
      %s161 = ssub.s32 %s11, 1
      // Predicated region
      $region13: #{tpu_custom_call.1} parent=11 // pred_check
        %p162 = pneg %p58
      $region14: #{tpu_custom_call.1} parent=11 // pred_check_branch
        %164 = sbr.rel (%p162) target = $region16
      $region15: #{tpu_custom_call.1} parent=11 // pred_region
        _
      $region16: #{tpu_custom_call.1} parent=11 // pred_fallthru
        _
      // Predicated region
      $region17: #{tpu_custom_call.1} parent=11 // pred_check
        %p165 = pneg %p79
      $region18: #{tpu_custom_call.1} parent=11 // pred_check_branch
        %167 = sbr.rel (%p165) target = $region20
      $region19: #{tpu_custom_call.1} parent=11 // pred_region
        _
      $region20: #{tpu_custom_call.1} parent=11 // pred_fallthru
        _
      // Predicated region
      $region21: #{tpu_custom_call.1} parent=11 // pred_check
        %p168 = pneg %p100
      $region22: #{tpu_custom_call.1} parent=11 // pred_check_branch
        %170 = sbr.rel (%p168) target = $region24
      $region23: #{tpu_custom_call.1} parent=11 // pred_region
        _
      $region24: #{tpu_custom_call.1} parent=11 // pred_fallthru
        _
      // Predicated region
      $region25: #{tpu_custom_call.1} parent=11 // pred_check
        %p171 = pneg %p121
      $region26: #{tpu_custom_call.1} parent=11 // pred_check_branch
        %173 = sbr.rel (%p171) target = $region28
      $region27: #{tpu_custom_call.1} parent=11 // pred_region
        _
      $region28: #{tpu_custom_call.1} parent=11 // pred_fallthru
        _
    $region12: #{tpu_custom_call.1} parent=5 // pred_fallthru
      _
    %p174 = scmp.lt.s32.totalorder %s11, 2
    // Predicated region
    $region29: #{tpu_custom_call.1} parent=5 // pred_check
      %p175 = pneg %p174
    $region30: #{tpu_custom_call.1} parent=5 // pred_check_branch
      %177 = sbr.rel (%p175) target = $region32
    $region31: #{tpu_custom_call.1} parent=5 // pred_region
      // Predicated region
      $region33: #{tpu_custom_call.1} parent=31 // pred_check
        %p178 = pneg %p31
      $region34: #{tpu_custom_call.1} parent=31 // pred_check_branch
        %180 = sbr.rel (%p178) target = $region36
      $region35: #{tpu_custom_call.1} parent=31 // pred_region
        %p181 = scmp.lt.s32.totalorder %s11, 1
        %s182 = scalar_select %p181, %s11, 1
        %s183 = smul.addr %s182, 4
        %s184 = scalar_lea.vmem %s0, %s183
      $region36: #{tpu_custom_call.1} parent=31 // pred_fallthru
        _
    $region32: #{tpu_custom_call.1} parent=5 // pred_fallthru
      _
    %p185 = scmp.le.s32.totalorder 1, %s11
    %p186 = scmp.lt.s32.totalorder %s11, 3
    %p187 = pnand %p185, %p186
    %p188 = pneg %p187
    // Predicated region
    $region37: #{tpu_custom_call.1} parent=5 // pred_check
      _
    $region38: #{tpu_custom_call.1} parent=5 // pred_check_branch
      %190 = sbr.rel (%p187) target = $region40
    $region39: #{tpu_custom_call.1} parent=5 // pred_region
      %s191 = ssub.s32 %s11, 1
      %p192 = scmp.lt.s32.totalorder %s16, 1
      %s193 = scalar_select %p192, %s16, 1
      %s194 = smul.addr %s193, 4
      %s195 = scalar_lea.vmem %s0, %s194
      %p196 = pneg %p37
      %p197 = pneg %p34
      %p198 = pneg %p58
      %p199 = pneg %p55
      %p200 = pneg %p79
      %p201 = pneg %p76
      %p202 = pneg %p100
      %p203 = pneg %p97
      %p204 = pneg %p121
      %p205 = pneg %p118
      %p206 = pneg %p147
      %p207 = pneg %p144
      %p208 = scmp.lt.s32.totalorder %s16, 1
      %s209 = scalar_select %p208, %s16, 1
      %s210 = smul.addr %s209, 4
      %s211 = smul.addr %s210, 8
      %s212 = scalar_lea.vmem %s5, %s211
      %p213 = scmp.lt.s32.totalorder %s16, 1
      %s214 = scalar_select %p213, %s16, 1
      %s215 = smul.addr %s214, 4
      %s216 = scalar_lea.vmem %s0, %s215
      %p217 = scmp.lt.s32.totalorder %s16, 1
      %s218 = scalar_select %p217, %s16, 1
      %s219 = smul.addr %s218, 4
      %s220 = smul.addr %s219, 8
      %s221 = scalar_lea.vmem %s5, %s220
      %v222 = vld [vmem:[%s216] sm:$0xf]
      %v223 = vld [vmem:[%s1] sm:$0xff]
      %v224 = vld [vmem:[%s1 + $0x8] sm:$0xff]
      %v225 = vld [vmem:[%s1 + $0x10] sm:$0xff]
      %v226 = vld [vmem:[%s1 + $0x18] sm:$0xff]
      %v227 = vld [vmem:[%s2] sm:$0xff]
      %v228 = vld [vmem:[%s2 + $0x8] sm:$0xff]
      %v229 = vld [vmem:[%s2 + $0x10] sm:$0xff]
      %v230 = vld [vmem:[%s2 + $0x18] sm:$0xff]
      %232 = vrot.lane.b32.xlu0 %v222, 1
      %v233 = vpop.permute.xlu0 %232
      %vm235 = vcmask 7168
      %v236 = vsel %vm235, 0.0, %v233
      %vm237 = vcmask 138240
      %v238 = vsel %vm237, %v236, 0.0
      %240 = vset.pattern.permute.xlu0 0
      %241 = vperm.xlu0 %240, %v223
      %v242 = vpop.permute.xlu0 %241
      %245 = vset.pattern.permute.xlu0 0
      %246 = vperm.xlu0 %245, %v224
      %v247 = vpop.permute.xlu0 %246
      %250 = vset.pattern.permute.xlu0 0
      %251 = vperm.xlu0 %250, %v225
      %v252 = vpop.permute.xlu0 %251
      %255 = vset.pattern.permute.xlu0 0
      %256 = vperm.xlu0 %255, %v226
      %v257 = vpop.permute.xlu0 %256
      %v259 = vperm.slane %v238, 0
      %v260 = vmul.f32 %v242, %v259
      %v261 = vmul.f32 %v247, %v259
      %v262 = vmul.f32 %v252, %v259
      %v263 = vmul.f32 %v257, %v259
      %v264 = vadd.f32 %v260, 0.0
      %v265 = vadd.f32 %v261, 0.0
      %v266 = vadd.f32 %v262, 0.0
      %v267 = vadd.f32 %v263, 0.0
      %268 = vset.pattern.permute.xlu0 1
      %269 = vperm.xlu0 %268, %v223
      %v270 = vpop.permute.xlu0 %269
      %272 = vset.pattern.permute.xlu0 1
      %273 = vperm.xlu0 %272, %v224
      %v274 = vpop.permute.xlu0 %273
      %276 = vset.pattern.permute.xlu0 1
      %277 = vperm.xlu0 %276, %v225
      %v278 = vpop.permute.xlu0 %277
      %280 = vset.pattern.permute.xlu0 1
      %281 = vperm.xlu0 %280, %v226
      %v282 = vpop.permute.xlu0 %281
      %v284 = vperm.slane %v238, 1
      %v285 = vmul.f32 %v270, %v284
      %v286 = vmul.f32 %v274, %v284
      %v287 = vmul.f32 %v278, %v284
      %v288 = vmul.f32 %v282, %v284
      %v289 = vadd.f32 %v264, %v285
      %v290 = vadd.f32 %v265, %v286
      %v291 = vadd.f32 %v266, %v287
      %v292 = vadd.f32 %v267, %v288
      %293 = vset.pattern.permute.xlu0 2
      %294 = vperm.xlu0 %293, %v223
      %v295 = vpop.permute.xlu0 %294
      %297 = vset.pattern.permute.xlu0 2
      %298 = vperm.xlu0 %297, %v224
      %v299 = vpop.permute.xlu0 %298
      %301 = vset.pattern.permute.xlu0 2
      %302 = vperm.xlu0 %301, %v225
      %v303 = vpop.permute.xlu0 %302
      %305 = vset.pattern.permute.xlu0 2
      %306 = vperm.xlu0 %305, %v226
      %v307 = vpop.permute.xlu0 %306
      %v309 = vperm.slane %v238, 2
      %v310 = vmul.f32 %v295, %v309
      %v311 = vmul.f32 %v299, %v309
      %v312 = vmul.f32 %v303, %v309
      %v313 = vmul.f32 %v307, %v309
      %v314 = vadd.f32 %v289, %v310
      %v315 = vadd.f32 %v290, %v311
      %v316 = vadd.f32 %v291, %v312
      %v317 = vadd.f32 %v292, %v313
      %318 = vset.pattern.permute.xlu0 3
      %319 = vperm.xlu0 %318, %v223
      %v320 = vpop.permute.xlu0 %319
      %322 = vset.pattern.permute.xlu0 3
      %323 = vperm.xlu0 %322, %v224
      %v324 = vpop.permute.xlu0 %323
      %326 = vset.pattern.permute.xlu0 3
      %327 = vperm.xlu0 %326, %v225
      %v328 = vpop.permute.xlu0 %327
      %330 = vset.pattern.permute.xlu0 3
      %331 = vperm.xlu0 %330, %v226
      %v332 = vpop.permute.xlu0 %331
      %v334 = vperm.slane %v238, 3
      %v335 = vmul.f32 %v320, %v334
      %v336 = vmul.f32 %v324, %v334
      %v337 = vmul.f32 %v328, %v334
      %v338 = vmul.f32 %v332, %v334
      %v339 = vadd.f32 %v314, %v335
      %v340 = vadd.f32 %v315, %v336
      %v341 = vadd.f32 %v316, %v337
      %v342 = vadd.f32 %v317, %v338
      %343 = vset.pattern.permute.xlu0 4
      %344 = vperm.xlu0 %343, %v223
      %v345 = vpop.permute.xlu0 %344
      %347 = vset.pattern.permute.xlu0 4
      %348 = vperm.xlu0 %347, %v224
      %v349 = vpop.permute.xlu0 %348
      %351 = vset.pattern.permute.xlu0 4
      %352 = vperm.xlu0 %351, %v225
      %v353 = vpop.permute.xlu0 %352
      %355 = vset.pattern.permute.xlu0 4
      %356 = vperm.xlu0 %355, %v226
      %v357 = vpop.permute.xlu0 %356
      %v359 = vmul.f32 %v345, %v259
      %v360 = vmul.f32 %v349, %v259
      %v361 = vmul.f32 %v353, %v259
      %v362 = vmul.f32 %v357, %v259
      %367 = vrot.lane.b32.xlu0 %v359, 127
      %v368 = vpop.permute.xlu0 %367
      %369 = vrot.lane.b32.xlu0 %v360, 127
      %v370 = vpop.permute.xlu0 %369
      %371 = vrot.lane.b32.xlu0 %v361, 127
      %v372 = vpop.permute.xlu0 %371
      %373 = vrot.lane.b32.xlu0 %v362, 127
      %v374 = vpop.permute.xlu0 %373
      %v379 = vadd.f32 %v339, %v368
      %v380 = vadd.f32 %v340, %v370
      %v381 = vadd.f32 %v341, %v372
      %v382 = vadd.f32 %v342, %v374
      %383 = vset.pattern.permute.xlu0 5
      %384 = vperm.xlu0 %383, %v223
      %v385 = vpop.permute.xlu0 %384
      %387 = vset.pattern.permute.xlu0 5
      %388 = vperm.xlu0 %387, %v224
      %v389 = vpop.permute.xlu0 %388
      %391 = vset.pattern.permute.xlu0 5
      %392 = vperm.xlu0 %391, %v225
      %v393 = vpop.permute.xlu0 %392
      %395 = vset.pattern.permute.xlu0 5
      %396 = vperm.xlu0 %395, %v226
      %v397 = vpop.permute.xlu0 %396
      %v399 = vmul.f32 %v385, %v284
      %v400 = vmul.f32 %v389, %v284
      %v401 = vmul.f32 %v393, %v284
      %v402 = vmul.f32 %v397, %v284
      %407 = vrot.lane.b32.xlu0 %v399, 127
      %v408 = vpop.permute.xlu0 %407
      %409 = vrot.lane.b32.xlu0 %v400, 127
      %v410 = vpop.permute.xlu0 %409
      %411 = vrot.lane.b32.xlu0 %v401, 127
      %v412 = vpop.permute.xlu0 %411
      %413 = vrot.lane.b32.xlu0 %v402, 127
      %v414 = vpop.permute.xlu0 %413
      %v419 = vadd.f32 %v379, %v408
      %v420 = vadd.f32 %v380, %v410
      %v421 = vadd.f32 %v381, %v412
      %v422 = vadd.f32 %v382, %v414
      %423 = vset.pattern.permute.xlu0 6
      %424 = vperm.xlu0 %423, %v223
      %v425 = vpop.permute.xlu0 %424
      %427 = vset.pattern.permute.xlu0 6
      %428 = vperm.xlu0 %427, %v224
      %v429 = vpop.permute.xlu0 %428
      %431 = vset.pattern.permute.xlu0 6
      %432 = vperm.xlu0 %431, %v225
      %v433 = vpop.permute.xlu0 %432
      %435 = vset.pattern.permute.xlu0 6
      %436 = vperm.xlu0 %435, %v226
      %v437 = vpop.permute.xlu0 %436
      %v439 = vmul.f32 %v425, %v309
      %v440 = vmul.f32 %v429, %v309
      %v441 = vmul.f32 %v433, %v309
      %v442 = vmul.f32 %v437, %v309
      %447 = vrot.lane.b32.xlu0 %v439, 127
      %v448 = vpop.permute.xlu0 %447
      %449 = vrot.lane.b32.xlu0 %v440, 127
      %v450 = vpop.permute.xlu0 %449
      %451 = vrot.lane.b32.xlu0 %v441, 127
      %v452 = vpop.permute.xlu0 %451
      %453 = vrot.lane.b32.xlu0 %v442, 127
      %v454 = vpop.permute.xlu0 %453
      %v459 = vadd.f32 %v419, %v448
      %v460 = vadd.f32 %v420, %v450
      %v461 = vadd.f32 %v421, %v452
      %v462 = vadd.f32 %v422, %v454
      %463 = vset.pattern.permute.xlu0 7
      %464 = vperm.xlu0 %463, %v223
      %v465 = vpop.permute.xlu0 %464
      %467 = vset.pattern.permute.xlu0 7
      %468 = vperm.xlu0 %467, %v224
      %v469 = vpop.permute.xlu0 %468
      %471 = vset.pattern.permute.xlu0 7
      %472 = vperm.xlu0 %471, %v225
      %v473 = vpop.permute.xlu0 %472
      %475 = vset.pattern.permute.xlu0 7
      %476 = vperm.xlu0 %475, %v226
      %v477 = vpop.permute.xlu0 %476
      %v479 = vmul.f32 %v465, %v334
      %v480 = vmul.f32 %v469, %v334
      %v481 = vmul.f32 %v473, %v334
      %v482 = vmul.f32 %v477, %v334
      %487 = vrot.lane.b32.xlu0 %v479, 127
      %v488 = vpop.permute.xlu0 %487
      %489 = vrot.lane.b32.xlu0 %v480, 127
      %v490 = vpop.permute.xlu0 %489
      %491 = vrot.lane.b32.xlu0 %v481, 127
      %v492 = vpop.permute.xlu0 %491
      %493 = vrot.lane.b32.xlu0 %v482, 127
      %v494 = vpop.permute.xlu0 %493
      %v499 = vadd.f32 %v459, %v488
      %v500 = vadd.f32 %v460, %v490
      %v501 = vadd.f32 %v461, %v492
      %v502 = vadd.f32 %v462, %v494
      %503 = vset.pattern.permute.xlu0 8
      %504 = vperm.xlu0 %503, %v223
      %v505 = vpop.permute.xlu0 %504
      %507 = vset.pattern.permute.xlu0 8
      %508 = vperm.xlu0 %507, %v224
      %v509 = vpop.permute.xlu0 %508
      %511 = vset.pattern.permute.xlu0 8
      %512 = vperm.xlu0 %511, %v225
      %v513 = vpop.permute.xlu0 %512
      %515 = vset.pattern.permute.xlu0 8
      %516 = vperm.xlu0 %515, %v226
      %v517 = vpop.permute.xlu0 %516
      %v519 = vmul.f32 %v505, %v259
      %v520 = vmul.f32 %v509, %v259
      %v521 = vmul.f32 %v513, %v259
      %v522 = vmul.f32 %v517, %v259
      %527 = vrot.lane.b32.xlu0 %v519, 126
      %v528 = vpop.permute.xlu0 %527
      %529 = vrot.lane.b32.xlu0 %v520, 126
      %v530 = vpop.permute.xlu0 %529
      %531 = vrot.lane.b32.xlu0 %v521, 126
      %v532 = vpop.permute.xlu0 %531
      %533 = vrot.lane.b32.xlu0 %v522, 126
      %v534 = vpop.permute.xlu0 %533
      %v539 = vadd.f32 %v499, %v528
      %v540 = vadd.f32 %v500, %v530
      %v541 = vadd.f32 %v501, %v532
      %v542 = vadd.f32 %v502, %v534
      %543 = vset.pattern.permute.xlu0 9
      %544 = vperm.xlu0 %543, %v223
      %v545 = vpop.permute.xlu0 %544
      %547 = vset.pattern.permute.xlu0 9
      %548 = vperm.xlu0 %547, %v224
      %v549 = vpop.permute.xlu0 %548
      %551 = vset.pattern.permute.xlu0 9
      %552 = vperm.xlu0 %551, %v225
      %v553 = vpop.permute.xlu0 %552
      %555 = vset.pattern.permute.xlu0 9
      %556 = vperm.xlu0 %555, %v226
      %v557 = vpop.permute.xlu0 %556
      %v559 = vmul.f32 %v545, %v284
      %v560 = vmul.f32 %v549, %v284
      %v561 = vmul.f32 %v553, %v284
      %v562 = vmul.f32 %v557, %v284
      %567 = vrot.lane.b32.xlu0 %v559, 126
      %v568 = vpop.permute.xlu0 %567
      %569 = vrot.lane.b32.xlu0 %v560, 126
      %v570 = vpop.permute.xlu0 %569
      %571 = vrot.lane.b32.xlu0 %v561, 126
      %v572 = vpop.permute.xlu0 %571
      %573 = vrot.lane.b32.xlu0 %v562, 126
      %v574 = vpop.permute.xlu0 %573
      %v579 = vadd.f32 %v539, %v568
      %v580 = vadd.f32 %v540, %v570
      %v581 = vadd.f32 %v541, %v572
      %v582 = vadd.f32 %v542, %v574
      %583 = vset.pattern.permute.xlu0 10
      %584 = vperm.xlu0 %583, %v223
      %v585 = vpop.permute.xlu0 %584
      %587 = vset.pattern.permute.xlu0 10
      %588 = vperm.xlu0 %587, %v224
      %v589 = vpop.permute.xlu0 %588
      %591 = vset.pattern.permute.xlu0 10
      %592 = vperm.xlu0 %591, %v225
      %v593 = vpop.permute.xlu0 %592
      %595 = vset.pattern.permute.xlu0 10
      %596 = vperm.xlu0 %595, %v226
      %v597 = vpop.permute.xlu0 %596
      %v599 = vmul.f32 %v585, %v309
      %v600 = vmul.f32 %v589, %v309
      %v601 = vmul.f32 %v593, %v309
      %v602 = vmul.f32 %v597, %v309
      %607 = vrot.lane.b32.xlu0 %v599, 126
      %v608 = vpop.permute.xlu0 %607
      %609 = vrot.lane.b32.xlu0 %v600, 126
      %v610 = vpop.permute.xlu0 %609
      %611 = vrot.lane.b32.xlu0 %v601, 126
      %v612 = vpop.permute.xlu0 %611
      %613 = vrot.lane.b32.xlu0 %v602, 126
      %v614 = vpop.permute.xlu0 %613
      %v619 = vadd.f32 %v579, %v608
      %v620 = vadd.f32 %v580, %v610
      %v621 = vadd.f32 %v581, %v612
      %v622 = vadd.f32 %v582, %v614
      %623 = vset.pattern.permute.xlu0 11
      %624 = vperm.xlu0 %623, %v223
      %v625 = vpop.permute.xlu0 %624
      %627 = vset.pattern.permute.xlu0 11
      %628 = vperm.xlu0 %627, %v224
      %v629 = vpop.permute.xlu0 %628
      %631 = vset.pattern.permute.xlu0 11
      %632 = vperm.xlu0 %631, %v225
      %v633 = vpop.permute.xlu0 %632
      %635 = vset.pattern.permute.xlu0 11
      %636 = vperm.xlu0 %635, %v226
      %v637 = vpop.permute.xlu0 %636
      %v639 = vmul.f32 %v625, %v334
      %v640 = vmul.f32 %v629, %v334
      %v641 = vmul.f32 %v633, %v334
      %v642 = vmul.f32 %v637, %v334
      %647 = vrot.lane.b32.xlu0 %v639, 126
      %v648 = vpop.permute.xlu0 %647
      %649 = vrot.lane.b32.xlu0 %v640, 126
      %v650 = vpop.permute.xlu0 %649
      %651 = vrot.lane.b32.xlu0 %v641, 126
      %v652 = vpop.permute.xlu0 %651
      %653 = vrot.lane.b32.xlu0 %v642, 126
      %v654 = vpop.permute.xlu0 %653
      %v659 = vadd.f32 %v619, %v648
      %v660 = vadd.f32 %v620, %v650
      %v661 = vadd.f32 %v621, %v652
      %v662 = vadd.f32 %v622, %v654
      %664 = vset.pattern.permute.xlu0 0
      %665 = vperm.xlu0 %664, %v227
      %v666 = vpop.permute.xlu0 %665
      %669 = vset.pattern.permute.xlu0 0
      %670 = vperm.xlu0 %669, %v228
      %v671 = vpop.permute.xlu0 %670
      %674 = vset.pattern.permute.xlu0 0
      %675 = vperm.xlu0 %674, %v229
      %v676 = vpop.permute.xlu0 %675
      %679 = vset.pattern.permute.xlu0 0
      %680 = vperm.xlu0 %679, %v230
      %v681 = vpop.permute.xlu0 %680
      %v683 = vadd.f32 %v659, %v666
      %v684 = vadd.f32 %v660, %v671
      %v685 = vadd.f32 %v661, %v676
      %v686 = vadd.f32 %v662, %v681
      %vm687 = vcmask 130048
      %v688 = vsel %vm687, %v683, 0.0
      %689 = vadd.xlane.f32.xlu0 %v688
      %v690 = vpop.xlane.xlu0 %689
      %v691 = vsel %vm687, %v684, 0.0
      %692 = vadd.xlane.f32.xlu0 %v691
      %v693 = vpop.xlane.xlu0 %692
      %v694 = vsel %vm687, %v685, 0.0
      %695 = vadd.xlane.f32.xlu0 %v694
      %v696 = vpop.xlane.xlu0 %695
      %v697 = vsel %vm687, %v686, 0.0
      %698 = vadd.xlane.f32.xlu0 %v697
      %v699 = vpop.xlane.xlu0 %698
      %v700 = vmul.f32 %v683, %v683
      %v701 = vmul.f32 %v684, %v684
      %v702 = vmul.f32 %v685, %v685
      %v703 = vmul.f32 %v686, %v686
      %v704 = vsel %vm687, %v700, 0.0
      %705 = vadd.xlane.f32.xlu0 %v704
      %v706 = vpop.xlane.xlu0 %705
      %v707 = vsel %vm687, %v701, 0.0
      %708 = vadd.xlane.f32.xlu0 %v707
      %v709 = vpop.xlane.xlu0 %708
      %v710 = vsel %vm687, %v702, 0.0
      %711 = vadd.xlane.f32.xlu0 %v710
      %v712 = vpop.xlane.xlu0 %711
      %v713 = vsel %vm687, %v703, 0.0
      %714 = vadd.xlane.f32.xlu0 %v713
      %v715 = vpop.xlane.xlu0 %714
      %v716 = vsel %vm235, %v690, %v706
      %v717 = vsel %vm235, %v693, %v709
      %v718 = vsel %vm235, %v696, %v712
      %v719 = vsel %vm235, %v699, %v715
      %v720 = vld [vmem:[%s3] sm:$0xff]
      %vm721 = vcmask 261120
      %v723 = vsel %vm721, %v720, 0
      %725 = vmatpush.msra.mxu0 0.0
      %726 = vmatpush.msra.mxu0 0.0
      %727 = vmatpush.msra.mxu0 0.0
      %728 = vmatpush.msra.mxu0 0.0
      %729 = vmatpush.msra.mxu0 0.0
      %730 = vmatpush.msra.mxu0 0.0
      %731 = vmatpush.msra.mxu0 0.0
      %732 = vmatpush.msra.mxu0 0.0
      %733 = vmatpush.msra.mxu0 0.0
      %734 = vmatpush.msra.mxu0 0.0
      %735 = vmatpush.msra.mxu0 0.0
      %736 = vmatpush.msra.mxu0 0.0
      %737 = vmatpush.msra.mxu0 %v719
      %738 = vmatpush.msra.mxu0 %v718
      %739 = vmatpush.msra.mxu0 %v717
      %740 = vmatpush.msra.mxu0 %v716
      %741 = vmatmul.f32.gmra.mxu0 %v723
      %v742 = vpop.f32.mrf.mxu0
      %v743 = vadd.f32 0.0, %v742
      %744 = vdwg.mxu0
      %v745 = vmul.f32 %v743, 0.015625
      %v746 = vmul.f32 %v745, %v745
      %748 = vrot.lane.b32.xlu0 %v746, 1
      %v749 = vpop.permute.xlu0 %748
      %v751 = vsub.f32 %v745, %v749
      %v752 = vmax.f32 %v751, 0.0
      %v753 = vadd.f32 %v752, 1e-05
      %v754 = vrsqrt.pop %v753
      %v755 = vmul.f32 %v754, %v753
      %v756 = vmul.f32 %v755, %v754
      %v757 = vmul.f32 0.5, %v756
      %v758 = vsub.f32 1.5, %v757
      %v759 = vmul.f32 %v754, %v758
      %vm760 = vweird.f32 %v753
      %vm761 = vweird.f32 %v754
      %vm762 = vmor %vm760, %vm761
      %v763 = vsel %vm762, %v754, %v759
      %v764 = vld [vmem:[%s4] sm:$0xff]
      %v765 = vld [vmem:[%s4 + $0x8] sm:$0xff]
      %v766 = vld [vmem:[%s4 + $0x10] sm:$0xff]
      %v767 = vld [vmem:[%s4 + $0x18] sm:$0xff]
      %v768 = vsel %vm235, %v745, %v763
      %vm769 = vcmask 64512
      %v771 = vsel %vm769, %v764, 0
      %v774 = vsel %vm769, %v765, 0
      %v777 = vsel %vm769, %v766, 0
      %v780 = vsel %vm769, %v767, 0
      %782 = vmatpush.msra.mxu0 0.0
      %783 = vmatpush.msra.mxu0 0.0
      %784 = vmatpush.msra.mxu0 0.0
      %785 = vmatpush.msra.mxu0 0.0
      %786 = vmatpush.msra.mxu0 0.0
      %787 = vmatpush.msra.mxu0 0.0
      %788 = vmatpush.msra.mxu0 0.0
      %789 = vmatpush.msra.mxu0 0.0
      %790 = vmatpush.msra.mxu0 0.0
      %791 = vmatpush.msra.mxu0 0.0
      %792 = vmatpush.msra.mxu0 0.0
      %793 = vmatpush.msra.mxu0 0.0
      %794 = vmatpush.msra.mxu0 0.0
      %795 = vmatpush.msra.mxu0 0.0
      %796 = vmatpush.msra.mxu0 0.0
      %797 = vmatpush.msra.mxu0 %v768
      %798 = vmatmul.f32.gmra.mxu0 %v771
      %v799 = vpop.f32.mrf.mxu0
      %v800 = vadd.f32 0.0, %v799
      %801 = vmatmul.f32.gmra.mxu0 %v774
      %v802 = vpop.f32.mrf.mxu0
      %v803 = vadd.f32 0.0, %v802
      %804 = vmatmul.f32.gmra.mxu0 %v777
      %v805 = vpop.f32.mrf.mxu0
      %v806 = vadd.f32 0.0, %v805
      %807 = vmatmul.f32.gmra.mxu0 %v780
      %v808 = vpop.f32.mrf.mxu0
      %v809 = vadd.f32 0.0, %v808
      %810 = vdwg.mxu0
      %v811 = vmul.f32 %v227, %v800
      %v812 = vmul.f32 %v228, %v803
      %v813 = vmul.f32 %v229, %v806
      %v814 = vmul.f32 %v230, %v809
      %819 = vrot.lane.b32.xlu0 %v811, 127
      %v820 = vpop.permute.xlu0 %819
      %821 = vrot.lane.b32.xlu0 %v812, 127
      %v822 = vpop.permute.xlu0 %821
      %823 = vrot.lane.b32.xlu0 %v813, 127
      %v824 = vpop.permute.xlu0 %823
      %825 = vrot.lane.b32.xlu0 %v814, 127
      %v826 = vpop.permute.xlu0 %825
      %v831 = vmul.f32 %v800, %v820
      %v832 = vmul.f32 %v803, %v822
      %v833 = vmul.f32 %v806, %v824
      %v834 = vmul.f32 %v809, %v826
      %839 = vrot.lane.b32.xlu0 %v831, 2
      %v840 = vpop.permute.xlu0 %839
      %841 = vrot.lane.b32.xlu0 %v832, 2
      %v842 = vpop.permute.xlu0 %841
      %843 = vrot.lane.b32.xlu0 %v833, 2
      %v844 = vpop.permute.xlu0 %843
      %845 = vrot.lane.b32.xlu0 %v834, 2
      %v846 = vpop.permute.xlu0 %845
      %v851 = vsub.f32 %v227, %v840
      %v852 = vsub.f32 %v228, %v842
      %v853 = vsub.f32 %v229, %v844
      %v854 = vsub.f32 %v230, %v846
      %855 = vset.pattern.permute.xlu0 1
      %856 = vperm.xlu0 %855, %v811
      %v857 = vpop.permute.xlu0 %856
      %859 = vset.pattern.permute.xlu0 1
      %860 = vperm.xlu0 %859, %v812
      %v861 = vpop.permute.xlu0 %860
      %863 = vset.pattern.permute.xlu0 1
      %864 = vperm.xlu0 %863, %v813
      %v865 = vpop.permute.xlu0 %864
      %867 = vset.pattern.permute.xlu0 1
      %868 = vperm.xlu0 %867, %v814
      %v869 = vpop.permute.xlu0 %868
      %v871 = vmul.f32 %v683, %v857
      %v872 = vmul.f32 %v684, %v861
      %v873 = vmul.f32 %v685, %v865
      %v874 = vmul.f32 %v686, %v869
      %876 = vset.pattern.permute.xlu0 2
      %877 = vperm.xlu0 %876, %v851
      %v878 = vpop.permute.xlu0 %877
      %881 = vset.pattern.permute.xlu0 2
      %882 = vperm.xlu0 %881, %v852
      %v883 = vpop.permute.xlu0 %882
      %886 = vset.pattern.permute.xlu0 2
      %887 = vperm.xlu0 %886, %v853
      %v888 = vpop.permute.xlu0 %887
      %891 = vset.pattern.permute.xlu0 2
      %892 = vperm.xlu0 %891, %v854
      %v893 = vpop.permute.xlu0 %892
      %v895 = vadd.f32 %v871, %v878
      %v896 = vadd.f32 %v872, %v883
      %v897 = vadd.f32 %v873, %v888
      %v898 = vadd.f32 %v874, %v893
      %v899 = vmul.f32 %v895, 1.442695
      %v900 = vpow.pop %v899
      %v901 = vmul.f32 %v896, 1.442695
      %v902 = vpow.pop %v901
      %v903 = vmul.f32 %v897, 1.442695
      %v904 = vpow.pop %v903
      %v905 = vmul.f32 %v898, 1.442695
      %v906 = vpow.pop %v905
      %v907 = vadd.f32 %v900, 2.0
      %v908 = vadd.f32 %v902, 2.0
      %v909 = vadd.f32 %v904, 2.0
      %v910 = vadd.f32 %v906, 2.0
      %v911 = vmul.f32 %v900, %v907
      %v912 = vmul.f32 %v902, %v908
      %v913 = vmul.f32 %v904, %v909
      %v914 = vmul.f32 %v906, %v910
      %v915 = vadd.f32 %v911, 2.0
      %v916 = vadd.f32 %v912, 2.0
      %v917 = vadd.f32 %v913, 2.0
      %v918 = vadd.f32 %v914, 2.0
      %v919 = vrcp.pop %v915
      %v920 = vmul.f32 %v915, %v919
      %v921 = vsub.f32 1.0, %v920
      %v922 = vmul.f32 %v919, %v921
      %v923 = vadd.f32 %v919, %v922
      %vm924 = vweird.f32 %v915
      %vm925 = vweird.f32 %v919
      %vm926 = vmor %vm924, %vm925
      %v927 = vsel %vm926, %v919, %v923
      %v928 = vand.u32 2147483647, %v915
      %vm929 = vcmp.eq.f32.partialorder %v928, 8.507059e+37
      %v930 = vand.u32 %v915, 2147483648
      %v931 = vor.u32 1.1754944e-38, %v930
      %v932 = vsel %vm929, %v931, %v927
      %v933 = vmul.f32 %v911, %v932
      %v934 = vrcp.pop %v916
      %v935 = vmul.f32 %v916, %v934
      %v936 = vsub.f32 1.0, %v935
      %v937 = vmul.f32 %v934, %v936
      %v938 = vadd.f32 %v934, %v937
      %vm939 = vweird.f32 %v916
      %vm940 = vweird.f32 %v934
      %vm941 = vmor %vm939, %vm940
      %v942 = vsel %vm941, %v934, %v938
      %v943 = vand.u32 2147483647, %v916
      %vm944 = vcmp.eq.f32.partialorder %v943, 8.507059e+37
      %v945 = vand.u32 %v916, 2147483648
      %v946 = vor.u32 1.1754944e-38, %v945
      %v947 = vsel %vm944, %v946, %v942
      %v948 = vmul.f32 %v912, %v947
      %v949 = vrcp.pop %v917
      %v950 = vmul.f32 %v917, %v949
      %v951 = vsub.f32 1.0, %v950
      %v952 = vmul.f32 %v949, %v951
      %v953 = vadd.f32 %v949, %v952
      %vm954 = vweird.f32 %v917
      %vm955 = vweird.f32 %v949
      %vm956 = vmor %vm954, %vm955
      %v957 = vsel %vm956, %v949, %v953
      %v958 = vand.u32 2147483647, %v917
      %vm959 = vcmp.eq.f32.partialorder %v958, 8.507059e+37
      %v960 = vand.u32 %v917, 2147483648
      %v961 = vor.u32 1.1754944e-38, %v960
      %v962 = vsel %vm959, %v961, %v957
      %v963 = vmul.f32 %v913, %v962
      %v964 = vrcp.pop %v918
      %v965 = vmul.f32 %v918, %v964
      %v966 = vsub.f32 1.0, %v965
      %v967 = vmul.f32 %v964, %v966
      %v968 = vadd.f32 %v964, %v967
      %vm969 = vweird.f32 %v918
      %vm970 = vweird.f32 %v964
      %vm971 = vmor %vm969, %vm970
      %v972 = vsel %vm971, %v964, %v968
      %v973 = vand.u32 2147483647, %v918
      %vm974 = vcmp.eq.f32.partialorder %v973, 8.507059e+37
      %v975 = vand.u32 %v918, 2147483648
      %v976 = vor.u32 1.1754944e-38, %v975
      %v977 = vsel %vm974, %v976, %v972
      %v978 = vmul.f32 %v914, %v977
      %vm979 = vcmp.gt.f32.partialorder %v895, 20.0
      %vm980 = vcmp.gt.f32.partialorder %v896, 20.0
      %vm981 = vcmp.gt.f32.partialorder %v897, 20.0
      %vm982 = vcmp.gt.f32.partialorder %v898, 20.0
      %v983 = vmul.f32 %v895, %v933
      %v984 = vmul.f32 %v896, %v948
      %v985 = vmul.f32 %v897, %v963
      %v986 = vmul.f32 %v898, %v978
      %v987 = vsel %vm979, %v895, %v983
      %v988 = vsel %vm980, %v896, %v984
      %v989 = vsel %vm981, %v897, %v985
      %v990 = vsel %vm982, %v898, %v986
      %991 = vst.msk [vmem:[%s221] sm:$0xff] %vm687, %v987
      %992 = vst.msk [vmem:[%s221 + $0x8] sm:$0xff] %vm687, %v988
      %993 = vst.msk [vmem:[%s221 + $0x10] sm:$0xff] %vm687, %v989
      %994 = vst.msk [vmem:[%s221 + $0x18] sm:$0xff] %vm687, %v990
      %p995 = scmp.lt.s32.totalorder %s16, 1
      %s996 = scalar_select %p995, %s16, 1
      %s997 = smul.addr %s996, 4
      %s998 = smul.addr %s997, 8
      %s999 = scalar_lea.vmem %s5, %s998
      // Predicated region
      $region41: #{tpu_custom_call.1} parent=39 // pred_check
        %p1000 = pneg %p144
      $region42: #{tpu_custom_call.1} parent=39 // pred_check_branch
        %1002 = sbr.rel (%p1000) target = $region44
      $region43: #{tpu_custom_call.1} parent=39 // pred_region
        _
      $region44: #{tpu_custom_call.1} parent=39 // pred_fallthru
        _
    $region40: #{tpu_custom_call.1} parent=5 // pred_fallthru
      _
    %p1003 = scmp.le.s32.totalorder 2, %s11
    // Predicated region
    $region45: #{tpu_custom_call.1} parent=5 // pred_check
      %p1004 = pneg %p1003
    $region46: #{tpu_custom_call.1} parent=5 // pred_check_branch
      %1006 = sbr.rel (%p1004) target = $region48
    $region47: #{tpu_custom_call.1} parent=5 // pred_region
      %s1007 = ssub.s32 %s11, 2
      // Predicated region
      $region49: #{tpu_custom_call.1} parent=47 // pred_check
        %p1008 = pneg %p150
      $region50: #{tpu_custom_call.1} parent=47 // pred_check_branch
        %1010 = sbr.rel (%p1008) target = $region52
      $region51: #{tpu_custom_call.1} parent=47 // pred_region
        %p1011 = scmp.lt.s32.totalorder %s17, 1
        %s1012 = scalar_select %p1011, %s17, 1
        %s1013 = smul.addr %s1012, 4
        %s1014 = smul.addr %s1013, 8
        %s1015 = scalar_lea.vmem %s5, %s1014
      $region52: #{tpu_custom_call.1} parent=47 // pred_fallthru
        _
    $region48: #{tpu_custom_call.1} parent=5 // pred_fallthru
      _
  $region6: #{tpu_custom_call.1} parent=0 // loop_footer
    %s15 = sadd.s32 1, %s11
  $region7: #{tpu_custom_call.1} parent=0 // loop_footer_branch
    %10 = sbr.rel target = $region3
  $region8: #{tpu_custom_call.1} parent=0 // loop_exit
    _

</llo_original>
